<compile_context>
chip_gen: v6e
topology: v6e:2x2x1
jax: 0.10.0
libtpu: 0.0.40
codegen_flags: <defaults>
</compile_context>

<pallas_src>
import jax
import jax.numpy as jnp
from jax import lax
from jax.experimental import pallas as pl
from jax.experimental.pallas import tpu as pltpu


def mlp_kernel(x_ref, w1_ref, b1_ref, w2t_ref, b2t_ref, o_ref):
    # Layer 1: Linear -> ReLU. MXU matmul with f32 accumulation, VPU bias + ReLU.
    h = jnp.dot(x_ref[...], w1_ref[...], preferred_element_type=jnp.float32)
    h = jnp.maximum(h + b1_ref[...], 0.0)                     # (TB, H)

    # Dropout(p=0.5): identity in eval mode.
    # TODO(synk): training-mode dropout would need pltpu.prng_seed /
    #             pltpu.prng_random_bits masking plus 1/(1-p) scaling.

    # Layer 2: Linear, emitted lane-dense as (O, TB): contract the hidden dim of
    # w2t (O, H) against the hidden dim of h (TB, H). For O=1 this directly yields
    # a (1, TB) row -> unmasked lane-dense stores, no (TB, 1) 128x lane padding.
    out = lax.dot_general(
        w2t_ref[...], h,
        dimension_numbers=(((1,), (1,)), ((), ())),
        preferred_element_type=jnp.float32)                    # (O, TB)
    o_ref[...] = out + b2t_ref[...]                            # b2t (O, 1) broadcasts over lanes


def mlp_forward(x, w1, b1, w2, b2, *, block_b=8192, gridless_max_b=8192):
    """x: (B, D_in); w1: (D_in, H); b1: (1, H) or (H,); w2: (H, O); b2: (1, O) or (O,).

    Returns (B, O) float32.
    """
    B, D_in = x.shape
    H = w1.shape[1]
    O = w2.shape[1]

    # f32 everywhere: the kernel is DMA-bound, bf16 casts would just add an extra
    # HBM pass over x (see perf review); accumulation is f32 regardless.
    x = x.astype(jnp.float32)
    w1 = w1.astype(jnp.float32)
    b1 = jnp.reshape(b1, (1, H)).astype(jnp.float32)
    w2t = jnp.transpose(w2).astype(jnp.float32)                # (O, H) layout plumbing
    b2t = jnp.reshape(b2, (O, 1)).astype(jnp.float32)

    if B <= gridless_max_b:
        # Gridless path: whole arrays resident in VMEM, no per-step overhead.
        out = pl.pallas_call(
            mlp_kernel,
            out_shape=jax.ShapeDtypeStruct((O, B), jnp.float32),
            in_specs=[pl.BlockSpec(memory_space=pltpu.MemorySpace.VMEM)] * 5,
            out_specs=pl.BlockSpec(memory_space=pltpu.MemorySpace.VMEM),
        )(x, w1, b1, w2t, b2t)
    else:
        tb = block_b
        n_blocks = pl.cdiv(B, tb)                              # >= 2 since B > gridless_max_b
        out = pl.pallas_call(
            mlp_kernel,
            out_shape=jax.ShapeDtypeStruct((O, B), jnp.float32),
            grid=(n_blocks,),
            in_specs=[
                pl.BlockSpec((tb, D_in), lambda i: (i, 0)),    # x: tiled over batch (ragged last block OK)
                pl.BlockSpec((D_in, H), lambda i: (0, 0)),     # w1: VMEM-resident
                pl.BlockSpec((1, H), lambda i: (0, 0)),        # b1: VMEM-resident
                pl.BlockSpec((O, H), lambda i: (0, 0)),        # w2 (transposed): VMEM-resident
                pl.BlockSpec((O, 1), lambda i: (0, 0)),        # b2 (column): VMEM-resident
            ],
            out_specs=pl.BlockSpec((O, tb), lambda i: (0, i)), # lane-dense output tiles
            compiler_params=pltpu.CompilerParams(
                dimension_semantics=("parallel",),             # v7x: shard batch across both TCs
                vmem_limit_bytes=48 * 1024 * 1024),            # big tile fits v5e's low default
        )(x, w1, b1, w2t, b2t)

    # Tiny wrapper-side relayout: (O, B) -> (B, O). For O=1 this is just a reshape.
    return jnp.transpose(out)


def init_params(key, input_size, hidden, output_size):
    """Deterministic init mimicking nn.Linear default (U[-1/sqrt(fan_in), 1/sqrt(fan_in)])."""
    k1, k2, k3, k4 = jax.random.split(key, 4)
    bound1 = 1.0 / jnp.sqrt(input_size)
    bound2 = 1.0 / jnp.sqrt(hidden)
    w1 = jax.random.uniform(k1, (input_size, hidden), jnp.float32, -bound1, bound1)
    b1 = jax.random.uniform(k2, (1, hidden), jnp.float32, -bound1, bound1)
    w2 = jax.random.uniform(k3, (hidden, output_size), jnp.float32, -bound2, bound2)
    b2 = jax.random.uniform(k4, (1, output_size), jnp.float32, -bound2, bound2)
    return w1, b1, w2, b2


if __name__ == "__main__":
    # Shapes implied by the module: tabular regression -> x: (batch, input_size),
    # hidden_layer_sizes=[32], output_size=1.
    batch, input_size, hidden, output_size = 8, 16, 32, 1

    key = jax.random.PRNGKey(0)
    kx, kp, kb = jax.random.split(key, 3)
    x = jax.random.normal(kx, (batch, input_size), jnp.float32)
    w1, b1, w2, b2 = init_params(kp, input_size, hidden, output_size)

    def ref_fwd(xs):
        return jnp.maximum(xs @ w1 + b1, 0.0) @ w2 + b2

    # 1) Gridless small-batch path (whole arrays in VMEM).
    out = jax.block_until_ready(mlp_forward(x, w1, b1, w2, b2))
    assert out.shape == (batch, output_size)
    assert jnp.allclose(out, ref_fwd(x), atol=1e-5, rtol=1e-5)

    # 2) Tiled ragged-batch path (small overrides so the test stays tiny while
    #    still exercising the partial-last-block masking and lane-dense out spec).
    big_b = 1032  # cdiv(1032, 512) = 3 blocks, last block has only 8 valid rows
    xb = jax.random.normal(kb, (big_b, input_size), jnp.float32)
    out_big = jax.block_until_ready(
        mlp_forward(xb, w1, b1, w2, b2, block_b=512, gridless_max_b=256))
    assert out_big.shape == (big_b, output_size)
    assert jnp.allclose(out_big, ref_fwd(xb), atol=1e-4, rtol=1e-4)

    print("KERNEL_OK")
</pallas_src>

<mosaic_0001>
module attributes {stable_mosaic.version = 11 : i64} {
  func.func @mlp_kernel(%arg0: memref<8x16xf32, #tpu.memory_space<vmem>>, %arg1: memref<16x32xf32, #tpu.memory_space<vmem>>, %arg2: memref<1x32xf32, #tpu.memory_space<vmem>>, %arg3: memref<1x32xf32, #tpu.memory_space<vmem>>, %arg4: memref<1x1xf32, #tpu.memory_space<vmem>>, %arg5: memref<1x8xf32, #tpu.memory_space<vmem>>) attributes {dimension_semantics = [], scalar_prefetch = 0 : i64, scratch_operands = 0 : i64, tpu.core_type = #tpu.core_type<tc>} {
    %c0 = arith.constant 0 : index
    %c0_0 = arith.constant 0 : index
    %0 = vector.load %arg0[%c0, %c0_0] : memref<8x16xf32, #tpu.memory_space<vmem>>, vector<8x16xf32>
    %c0_1 = arith.constant 0 : index
    %c0_2 = arith.constant 0 : index
    %1 = vector.load %arg1[%c0_1, %c0_2] : memref<16x32xf32, #tpu.memory_space<vmem>>, vector<16x32xf32>
    %cst = arith.constant dense<0.000000e+00> : vector<8x32xf32>
    %2 = tpu.matmul %0, %1, %cst {dimension_numbers = #tpu.dot_dimension_numbers<[1], [0], [0], [1], [0, 0, 1, 1], [], []>} : vector<8x16xf32>, vector<16x32xf32>, vector<8x32xf32> -> vector<8x32xf32>
    %c0_3 = arith.constant 0 : index
    %c0_4 = arith.constant 0 : index
    %3 = vector.load %arg2[%c0_3, %c0_4] : memref<1x32xf32, #tpu.memory_space<vmem>>, vector<1x32xf32>
    %4 = vector.broadcast %3 : vector<1x32xf32> to vector<8x32xf32>
    %5 = arith.addf %2, %4 : vector<8x32xf32>
    %cst_5 = arith.constant 0.000000e+00 : f32
    %6 = vector.broadcast %cst_5 : f32 to vector<8x32xf32>
    %7 = arith.maximumf %5, %6 : vector<8x32xf32>
    %c0_6 = arith.constant 0 : index
    %c0_7 = arith.constant 0 : index
    %8 = vector.load %arg3[%c0_6, %c0_7] : memref<1x32xf32, #tpu.memory_space<vmem>>, vector<1x32xf32>
    %cst_8 = arith.constant dense<0.000000e+00> : vector<1x8xf32>
    %9 = tpu.matmul %8, %7, %cst_8 {dimension_numbers = #tpu.dot_dimension_numbers<[1], [1], [0], [0], [0, 0, 1, 0], [], []>} : vector<1x32xf32>, vector<8x32xf32>, vector<1x8xf32> -> vector<1x8xf32>
    %c0_9 = arith.constant 0 : index
    %c0_10 = arith.constant 0 : index
    %10 = vector.load %arg4[%c0_9, %c0_10] : memref<1x1xf32, #tpu.memory_space<vmem>>, vector<1x1xf32>
    %11 = vector.broadcast %10 : vector<1x1xf32> to vector<1x8xf32>
    %12 = arith.addf %9, %11 : vector<1x8xf32>
    %c0_11 = arith.constant 0 : index
    %c0_12 = arith.constant 0 : index
    %13 = vector.load %arg5[%c0_11, %c0_12] : memref<1x8xf32, #tpu.memory_space<vmem>>, vector<1x8xf32>
    tpu.vector_store %arg5[%c0_11, %c0_12], %12 {strides = array<i32>} : memref<1x8xf32, #tpu.memory_space<vmem>>, vector<1x8xf32>,
    return
  }
}

</mosaic_0001>

<llo_original>
// kernel: tpu_custom_call.1
$region0: #{tpu_custom_call.1}
  #allocation0 [shape = 'u32[]', space=smem, size = 0x4, offset = 0x4, fixed_abs, tag = 'smem constant byte address 0x4 - core index']
  #allocation1 [shape = 'u32[144,128]{1,0:T(1,128)}', space=vmem, size = 0x12000, scoped, tag = 'internal scratch']
  #allocation2 [shape = 'f32[1,1]{1,0:T(1,128)S(1)}', space=vmem, size = 0x200, scoped, tag = 'scoped memory for tpu_custom_call.1']
  %s0 = inlined_call_operand.hbm [shape: f32[8,16], index: 0, kind: input, shape index: {}]
  %s1 = inlined_call_operand.hbm [shape: f32[16,32], index: 1, kind: input, shape index: {}]
  %s2 = inlined_call_operand.vmem [shape: f32[1,32], index: 2, kind: input, shape index: {}]
  %s3 = inlined_call_operand.vmem [shape: f32[1,32], index: 3, kind: input, shape index: {}]
  %s4 = inlined_call_operand.<no memory space> [shape: f32[1,1], index: 4, kind: input, shape index: {}]
  %s5 = inlined_call_operand.hbm [shape: f32[1,8], index: 5, kind: output, shape index: {}]
  %s6 = sld [smem:[#allocation0]]
  $region38: #{tpu_custom_call.1} parent=0
    _
  %s8 = ssub.s32 1, %s6
  %s9 = scalar_select 0, %s8, %s6
  %v10 = vstv %s4
  %11 = vst [vmem:[#allocation2] sm:$0x1] %v10
  $region1: #{tpu_custom_call.1} parent=0
    #allocation3 [shape = 'u8[4096]{0}', space=vmem, size = 0x1000, scoped, tag = 'input window, operand 0, single buffered']
    #allocation4 [shape = 's32[1]{0}', space=sflag, size = 0x4, scoped, tag = 'scoped memory for tpu_custom_call.1']
    #allocation5 [shape = 's32[1]{0}', space=sflag, size = 0x4, scoped, tag = 'scoped memory for tpu_custom_call.1']
    #allocation6 [shape = 'u8[8192]{0}', space=vmem, size = 0x2000, scoped, tag = 'input window, operand 1, single buffered']
    #allocation7 [shape = 's32[1]{0}', space=sflag, size = 0x4, scoped, tag = 'scoped memory for tpu_custom_call.1']
    #allocation8 [shape = 'u8[512]{0}', space=vmem, size = 0x400, scoped, tag = 'output window, operand 0, single buffered']
    %12 = vsyncpa [#allocation4], 0
    %13 = vsyncpa [#allocation7], 0
    %14 = vsyncpa [#allocation5], 0
    // Predicated region
    $region2: #{tpu_custom_call.1} parent=1 // pred_check
      _
    $region3: #{tpu_custom_call.1} parent=1 // pred_check_branch
      %16 = sbr.rel (0) target = $region5
    $region4: #{tpu_custom_call.1} parent=1 // pred_region
      %s18 = ssub.s32 128, 128
      %19 = vsyncadd [#allocation4], %s18
      %s21 = sshll.u32 [#allocation3], 4
      %s22 = int_to_ptr.vmem [resolvable:$true] %s21
      %24 = dma.hbm_to_vmem [thread:$0]  %s0, 128, %s22, [#allocation4]
    $region5: #{tpu_custom_call.1} parent=1 // pred_fallthru
      _
    // Predicated region
    $region6: #{tpu_custom_call.1} parent=1 // pred_check
      _
    $region7: #{tpu_custom_call.1} parent=1 // pred_check_branch
      %26 = sbr.rel (0) target = $region9
    $region8: #{tpu_custom_call.1} parent=1 // pred_region
      %s28 = ssub.s32 256, 256
      %29 = vsyncadd [#allocation7], %s28
      %s30 = sshll.u32 [#allocation6], 4
      %s31 = int_to_ptr.vmem [resolvable:$true] %s30
      %36 = dma.hbm_to_vmem [thread:$0]  %s1, 256, %s31, [#allocation7], 128, 128, 8
    $region9: #{tpu_custom_call.1} parent=1 // pred_fallthru
      _
    // Predicated region
    $region10: #{tpu_custom_call.1} parent=1 // pred_check
      _
    $region11: #{tpu_custom_call.1} parent=1 // pred_check_branch
      %38 = sbr.rel (0) target = $region13
    $region12: #{tpu_custom_call.1} parent=1 // pred_region
      _
    $region13: #{tpu_custom_call.1} parent=1 // pred_fallthru
      _
    // Predicated region
    $region14: #{tpu_custom_call.1} parent=1 // pred_check
      _
    $region15: #{tpu_custom_call.1} parent=1 // pred_check_branch
      %40 = sbr.rel (0) target = $region17
    $region16: #{tpu_custom_call.1} parent=1 // pred_region
      _
    $region17: #{tpu_custom_call.1} parent=1 // pred_fallthru
      _
    // Predicated region
    $region18: #{tpu_custom_call.1} parent=1 // pred_check
      _
    $region19: #{tpu_custom_call.1} parent=1 // pred_check_branch
      %42 = sbr.rel (0) target = $region21
    $region20: #{tpu_custom_call.1} parent=1 // pred_region
      _
    $region21: #{tpu_custom_call.1} parent=1 // pred_fallthru
      _
    // Predicated region
    $region22: #{tpu_custom_call.1} parent=1 // pred_check
      _
    $region23: #{tpu_custom_call.1} parent=1 // pred_check_branch
      %44 = sbr.rel (0) target = $region25
    $region24: #{tpu_custom_call.1} parent=1 // pred_region
      %45 = dma.done [#allocation4], 128
    $region25: #{tpu_custom_call.1} parent=1 // pred_fallthru
      _
    // Predicated region
    $region26: #{tpu_custom_call.1} parent=1 // pred_check
      _
    $region27: #{tpu_custom_call.1} parent=1 // pred_check_branch
      %47 = sbr.rel (0) target = $region29
    $region28: #{tpu_custom_call.1} parent=1 // pred_region
      %48 = dma.done [#allocation7], 256
    $region29: #{tpu_custom_call.1} parent=1 // pred_fallthru
      _
    %v49 = vld [vmem:[#allocation3] sm:$0xff]
    %v50 = vld [vmem:[#allocation6] sm:$0xff]
    %v51 = vld [vmem:[#allocation6 + $0x8] sm:$0xff]
    %v52 = vld [vmem:[%s2] sm:$0x1]
    %v54 = vlaneseq
    %v55 = vshrl.u32 %v54, 7
    %v56 = vsub.s32 0, %v55
    %v57 = vrot.slane %v52, %v56
    %vm59 = vcmask 130048
    %v61 = vsel %vm59, %v49, 0
    %63 = vmatprep.subr.mxu0 0.0
    %64 = vmatpush1.msra.mxu0 0.0
    %65 = vmatprep.subr.mxu0 0.0
    %66 = vmatpush1.msra.mxu0 0.0
    %67 = vmatprep.subr.mxu0 0.0
    %68 = vmatpush1.msra.mxu0 0.0
    %69 = vmatprep.subr.mxu0 0.0
    %70 = vmatpush1.msra.mxu0 0.0
    %71 = vmatprep.subr.mxu0 0.0
    %72 = vmatpush1.msra.mxu0 0.0
    %73 = vmatprep.subr.mxu0 0.0
    %74 = vmatpush1.msra.mxu0 0.0
    %75 = vmatprep.subr.mxu0 0.0
    %76 = vmatpush1.msra.mxu0 0.0
    %77 = vmatprep.subr.mxu0 0.0
    %78 = vmatpush1.msra.mxu0 0.0
    %79 = vmatprep.subr.mxu0 0.0
    %80 = vmatpush1.msra.mxu0 0.0
    %81 = vmatprep.subr.mxu0 0.0
    %82 = vmatpush1.msra.mxu0 0.0
    %83 = vmatprep.subr.mxu0 0.0
    %84 = vmatpush1.msra.mxu0 0.0
    %85 = vmatprep.subr.mxu0 0.0
    %86 = vmatpush1.msra.mxu0 0.0
    %87 = vmatprep.subr.mxu0 0.0
    %88 = vmatpush1.msra.mxu0 0.0
    %89 = vmatprep.subr.mxu0 0.0
    %90 = vmatpush1.msra.mxu0 0.0
    %91 = vmatprep.subr.mxu0 0.0
    %92 = vmatpush1.msra.mxu0 %v51
    %93 = vmatprep.subr.mxu0 0.0
    %94 = vmatpush1.msra.mxu0 %v50
    %95 = vmatprep.subr.mxu0 0.0
    %96 = vmatpush2.msra.mxu0 0.0
    %97 = vmatprep.subr.mxu0 0.0
    %98 = vmatpush2.msra.mxu0 0.0
    %99 = vmatprep.subr.mxu0 0.0
    %100 = vmatpush2.msra.mxu0 0.0
    %101 = vmatprep.subr.mxu0 0.0
    %102 = vmatpush2.msra.mxu0 0.0
    %103 = vmatprep.subr.mxu0 0.0
    %104 = vmatpush2.msra.mxu0 0.0
    %105 = vmatprep.subr.mxu0 0.0
    %106 = vmatpush2.msra.mxu0 0.0
    %107 = vmatprep.subr.mxu0 0.0
    %108 = vmatpush2.msra.mxu0 0.0
    %109 = vmatprep.subr.mxu0 0.0
    %110 = vmatpush2.msra.mxu0 0.0
    %111 = vmatprep.subr.mxu0 0.0
    %112 = vmatpush2.msra.mxu0 0.0
    %113 = vmatprep.subr.mxu0 0.0
    %114 = vmatpush2.msra.mxu0 0.0
    %115 = vmatprep.subr.mxu0 0.0
    %116 = vmatpush2.msra.mxu0 0.0
    %117 = vmatprep.subr.mxu0 0.0
    %118 = vmatpush2.msra.mxu0 0.0
    %119 = vmatprep.subr.mxu0 0.0
    %120 = vmatpush2.msra.mxu0 0.0
    %121 = vmatprep.subr.mxu0 0.0
    %122 = vmatpush2.msra.mxu0 0.0
    %123 = vmatprep.subr.mxu0 0.0
    %124 = vmatpush2.msra.mxu0 0.0
    %125 = vmatprep.subr.mxu0 0.0
    %126 = vmatpush2.msra.mxu0 0.0
    %127 = vmatprep.mubr.f32.mxu0 0.0
    %128 = vmatmul.mubr.f32.gmra.mxu0 %v61
    %v129 = vpop.f32.mrf.mxu0
    %v130 = vadd.f32 %v57, %v129
    %v131 = vpop.f32.mrf.mxu0
    %132 = vdwg.mxu0
    %v133 = vmax.f32 %v130, 0.0
    %v134 = vld [vmem:[%s3] sm:$0x1]
    %v135 = vld [vmem:[#allocation2] sm:$0x1]
    %137 = vset.pattern.permute.xlu0 0
    %138 = vperm.xlu0 %137, %v135
    %v139 = vpop.permute.xlu0 %138
    %v141 = vlaneseq
    %v142 = vshrl.u32 %v141, 7
    %v143 = vsub.s32 0, %v142
    %v144 = vrot.slane %v139, %v143
    %vm145 = vcmask 261120
    %v147 = vsel %vm145, %v134, 0
    %v150 = vsel %vm145, %v133, 0
    %152 = vmatprep.subr.mxu0 0.0
    %153 = vmatpush1.xpose.msra.mxu0 0.0
    %154 = vmatprep.subr.mxu0 0.0
    %155 = vmatpush1.xpose.msra.mxu0 0.0
    %156 = vmatprep.subr.mxu0 0.0
    %157 = vmatpush1.xpose.msra.mxu0 0.0
    %158 = vmatprep.subr.mxu0 0.0
    %159 = vmatpush1.xpose.msra.mxu0 0.0
    %160 = vmatprep.subr.mxu0 0.0
    %161 = vmatpush1.xpose.msra.mxu0 0.0
    %162 = vmatprep.subr.mxu0 0.0
    %163 = vmatpush1.xpose.msra.mxu0 0.0
    %164 = vmatprep.subr.mxu0 0.0
    %165 = vmatpush1.xpose.msra.mxu0 0.0
    %166 = vmatprep.subr.mxu0 0.0
    %167 = vmatpush1.xpose.msra.mxu0 0.0
    %168 = vmatprep.subr.mxu0 0.0
    %169 = vmatpush1.xpose.msra.mxu0 0.0
    %170 = vmatprep.subr.mxu0 0.0
    %171 = vmatpush1.xpose.msra.mxu0 0.0
    %172 = vmatprep.subr.mxu0 0.0
    %173 = vmatpush1.xpose.msra.mxu0 0.0
    %174 = vmatprep.subr.mxu0 0.0
    %175 = vmatpush1.xpose.msra.mxu0 0.0
    %176 = vmatprep.subr.mxu0 0.0
    %177 = vmatpush1.xpose.msra.mxu0 0.0
    %178 = vmatprep.subr.mxu0 0.0
    %179 = vmatpush1.xpose.msra.mxu0 0.0
    %180 = vmatprep.subr.mxu0 0.0
    %181 = vmatpush1.xpose.msra.mxu0 0.0
    %182 = vmatprep.subr.mxu0 0.0
    %183 = vmatpush1.xpose.msra.mxu0 %v150
    %184 = vmatprep.subr.mxu0 0.0
    %185 = vmatpush2.xpose.msra.mxu0 0.0
    %186 = vmatprep.subr.mxu0 0.0
    %187 = vmatpush2.xpose.msra.mxu0 0.0
    %188 = vmatprep.subr.mxu0 0.0
    %189 = vmatpush2.xpose.msra.mxu0 0.0
    %190 = vmatprep.subr.mxu0 0.0
    %191 = vmatpush2.xpose.msra.mxu0 0.0
    %192 = vmatprep.subr.mxu0 0.0
    %193 = vmatpush2.xpose.msra.mxu0 0.0
    %194 = vmatprep.subr.mxu0 0.0
    %195 = vmatpush2.xpose.msra.mxu0 0.0
    %196 = vmatprep.subr.mxu0 0.0
    %197 = vmatpush2.xpose.msra.mxu0 0.0
    %198 = vmatprep.subr.mxu0 0.0
    %199 = vmatpush2.xpose.msra.mxu0 0.0
    %200 = vmatprep.subr.mxu0 0.0
    %201 = vmatpush2.xpose.msra.mxu0 0.0
    %202 = vmatprep.subr.mxu0 0.0
    %203 = vmatpush2.xpose.msra.mxu0 0.0
    %204 = vmatprep.subr.mxu0 0.0
    %205 = vmatpush2.xpose.msra.mxu0 0.0
    %206 = vmatprep.subr.mxu0 0.0
    %207 = vmatpush2.xpose.msra.mxu0 0.0
    %208 = vmatprep.subr.mxu0 0.0
    %209 = vmatpush2.xpose.msra.mxu0 0.0
    %210 = vmatprep.subr.mxu0 0.0
    %211 = vmatpush2.xpose.msra.mxu0 0.0
    %212 = vmatprep.subr.mxu0 0.0
    %213 = vmatpush2.xpose.msra.mxu0 0.0
    %214 = vmatprep.subr.mxu0 0.0
    %215 = vmatpush2.xpose.msra.mxu0 0.0
    %216 = vmatprep.mubr.f32.mxu0 0.0
    %217 = vmatmul.mubr.f32.gmra.mxu0 %v147
    %v218 = vpop.f32.mrf.mxu0
    %v219 = vadd.f32 %v144, %v218
    %v220 = vpop.f32.mrf.mxu0
    %221 = vdwg.mxu0
    %vm222 = vcmask 57344
    %223 = vst.msk [vmem:[#allocation8] sm:$0x1] %vm222, %v219
    // Predicated region
    $region30: #{tpu_custom_call.1} parent=1 // pred_check
      _
    $region31: #{tpu_custom_call.1} parent=1 // pred_check_branch
      %225 = sbr.rel (0) target = $region33
    $region32: #{tpu_custom_call.1} parent=1 // pred_region
      %s227 = ssub.s32 16, 16
      %228 = vsyncadd [#allocation5], %s227
      %s230 = sshll.u32 [#allocation8], 4
      %s231 = int_to_ptr.vmem [resolvable:$true] %s230
      %233 = dma.vmem_to_hbm [thread:$0]  %s231, 16, %s5, [#allocation5]
    $region33: #{tpu_custom_call.1} parent=1 // pred_fallthru
      _
    // Predicated region
    $region34: #{tpu_custom_call.1} parent=1 // pred_check
      _
    $region35: #{tpu_custom_call.1} parent=1 // pred_check_branch
      %235 = sbr.rel (0) target = $region37
    $region36: #{tpu_custom_call.1} parent=1 // pred_region
      %236 = dma.done [#allocation5], 16
    $region37: #{tpu_custom_call.1} parent=1 // pred_fallthru
      _
    %237 = vsyncpa [#allocation4], 1
    %238 = vsyncpa [#allocation7], 1
    %239 = vsyncpa [#allocation5], 1

</llo_original>
